<compile_context>
chip_gen: v7x
topology: tpu7x:2x2x1
jax: 0.10.0
libtpu: 0.0.40
codegen_flags: <defaults>
</compile_context>

<pallas_src>
import functools

import jax
import jax.numpy as jnp
from jax.experimental import pallas as pl
from jax.experimental.pallas import tpu as pltpu

LANE = 128      # lane width (last dim)
SUBLANE = 8     # f32 sublane tile (second-to-last dim)


def _round_up(x, m):
    return (x + m - 1) // m * m


def _fused_mlp_kernel(*refs, n_layers):
    """refs = (x_ref, w0, b0, w1, b1, ..., wL, bL, o_ref).

    Entire MLP in one kernel body: intermediates live in vregs/VMEM only and
    never round-trip through HBM.
    """
    x_ref = refs[0]
    o_ref = refs[-1]
    wb = refs[1:-1]

    h = x_ref[...].astype(jnp.float32)
    for i in range(n_layers + 1):
        w = wb[2 * i][...]                 # bf16 weights -> MXU operand dtype
        b = wb[2 * i + 1][...]             # f32 bias, (1, F) broadcasts over batch
        # bf16 operands, f32 accumulation: full-rate MXU path on v6e/v7x.
        y = jnp.dot(h.astype(jnp.bfloat16), w,
                    preferred_element_type=jnp.float32) + b
        if i < n_layers:
            h = jnp.tanh(y)    # f32 EUP tanh (v5e-safe); dropout = identity (eval)
        else:
            h = y
    o_ref[...] = h.astype(o_ref.dtype)


def init_oc_net_params(key, input_size, output_size, hyper_results):
    """Parameter init matching OC_Net's layer shapes (nn.Linear default bound),
    stored pre-padded to lane-dense (multiple-of-128) feature dims.
    Weights are stored in bf16 (MXU operands), biases in f32."""
    n_layers = hyper_results["n_layers"]
    n_units = [input_size]
    for i in range(n_layers):
        n_units.append(hyper_results[f"n_units_l{i}"])
    n_units.append(output_size)

    params = []
    for i in range(n_layers + 1):
        fan_in, fan_out = n_units[i], n_units[i + 1]
        fi_pad, fo_pad = _round_up(fan_in, LANE), _round_up(fan_out, LANE)
        key, wk, bk = jax.random.split(key, 3)
        bound = float(fan_in) ** -0.5  # same bound as nn.Linear default init
        w = jax.random.uniform(wk, (fan_in, fan_out), jnp.float32, -bound, bound)
        b = jax.random.uniform(bk, (1, fan_out), jnp.float32, -bound, bound)
        w_pad = (jnp.zeros((fi_pad, fo_pad), jnp.float32)
                 .at[:fan_in, :fan_out].set(w)
                 .astype(jnp.bfloat16))
        b_pad = jnp.zeros((1, fo_pad), jnp.float32).at[:, :fan_out].set(b)
        params.append((w_pad, b_pad))
    return params, n_units


def oc_net_forward(x, params, *, output_size, batch_tile=512):
    """Fused forward pass. x: (B, input_size) -> (B, output_size)."""
    B, In = x.shape
    n_layers = len(params) - 1
    In_pad = params[0][0].shape[0]
    Out_pad = params[-1][0].shape[1]

    # Batch tiling: one lane-/sublane-aligned tile per grid step. Keep >= 2
    # grid steps when possible so v7x's two TensorCores both get work.
    TB = min(batch_tile, _round_up(B, SUBLANE))
    if TB > SUBLANE and _round_up(B, TB) // TB < 2:
        TB = max(SUBLANE, _round_up((TB + 1) // 2, SUBLANE))
    B_pad = _round_up(B, TB)

    # Pad the input only when actually needed (pad/slice are extra full-batch
    # HBM passes in the mem-bound regime).
    if (B_pad != B) or (In_pad != In):
        x_in = jnp.zeros((B_pad, In_pad), x.dtype).at[:B, :In].set(x)
    else:
        x_in = x

    flat_params = []
    in_specs = [pl.BlockSpec((TB, In_pad), lambda i: (i, 0))]
    for (w, b) in params:
        flat_params += [w, b]
        # Constant block index -> fetched once; single-buffer (Buffered(1))
        # halves the resident-parameter VMEM footprint for free.
        in_specs.append(pl.BlockSpec(w.shape, lambda i: (0, 0),
                                     pipeline_mode=pl.Buffered(1)))
        in_specs.append(pl.BlockSpec(b.shape, lambda i: (0, 0),
                                     pipeline_mode=pl.Buffered(1)))

    # Explicit scoped-VMEM limit: resident params (single-buffered) +
    # double-buffered input/output tiles + largest intermediate, +25% headroom.
    param_bytes = sum(w.size * w.dtype.itemsize + b.size * b.dtype.itemsize
                      for (w, b) in params)
    max_h_pad = max(w.shape[1] for (w, _) in params)
    act_bytes = (2 * TB * In_pad + 2 * TB * Out_pad + 2 * TB * max_h_pad) * 4
    vmem_limit = int(min(max((param_bytes + act_bytes) * 1.25, 32 * 2**20),
                         64 * 2**20))

    # Advisory cost estimate for XLA's scheduler.
    flops, transcendentals = 0, 0
    bytes_accessed = (x_in.size + B_pad * Out_pad) * 4
    for li, (w, b) in enumerate(params):
        flops += 2 * B_pad * w.shape[0] * w.shape[1] + B_pad * w.shape[1]
        bytes_accessed += w.size * w.dtype.itemsize + b.size * b.dtype.itemsize
        if li < n_layers:
            transcendentals += B_pad * w.shape[1]

    kernel = functools.partial(_fused_mlp_kernel, n_layers=n_layers)
    out_pad = pl.pallas_call(
        kernel,
        out_shape=jax.ShapeDtypeStruct((B_pad, Out_pad), x.dtype),
        grid=(B_pad // TB,),
        in_specs=in_specs,
        out_specs=pl.BlockSpec((TB, Out_pad), lambda i: (i, 0)),
        compiler_params=pltpu.CompilerParams(
            dimension_semantics=("parallel",),
            vmem_limit_bytes=vmem_limit,
        ),
        cost_estimate=pl.CostEstimate(
            flops=flops,
            transcendentals=transcendentals,
            bytes_accessed=bytes_accessed,
        ),
    )(x_in, *flat_params)

    if (B_pad == B) and (Out_pad == output_size):
        return out_pad
    return out_pad[:B, :output_size]


if __name__ == "__main__":
    key = jax.random.PRNGKey(0)

    # Small synthetic config consistent with the module's __init__.
    input_size = 16
    output_size = 8
    hyper_results = {
        "n_layers": 2,
        "n_units_l0": 32,
        "n_units_l1": 32,
        "dropout_l0": 0.1,  # identity in eval forward
        "dropout_l1": 0.1,
    }
    batch = 8

    key, pkey, xkey = jax.random.split(key, 3)
    params, n_units = init_oc_net_params(pkey, input_size, output_size, hyper_results)
    x = jax.random.normal(xkey, (batch, input_size), jnp.float32)

    out = jax.block_until_ready(oc_net_forward(x, params, output_size=output_size))

    # Pure-JAX reference on the UNPADDED weights, mirroring the kernel's
    # casting scheme (bf16 dot operands, f32 accumulation / bias / tanh).
    # Verifies the fused kernel math AND that zero-padding is exact.
    n_layers = hyper_results["n_layers"]
    ref = x.astype(jnp.float32)
    for i in range(n_layers):
        w, b = params[i]
        w = w[: n_units[i], : n_units[i + 1]]
        b = b[:, : n_units[i + 1]]
        ref = jnp.tanh(jnp.dot(ref.astype(jnp.bfloat16), w,
                               preferred_element_type=jnp.float32) + b)
    w, b = params[-1]
    ref = jnp.dot(ref.astype(jnp.bfloat16), w[: n_units[-2], : n_units[-1]],
                  preferred_element_type=jnp.float32) + b[:, : n_units[-1]]

    assert out.shape == (batch, output_size)
    assert jnp.allclose(out, ref, atol=2e-3, rtol=2e-3), (
        float(jnp.max(jnp.abs(out - ref))))

    print("KERNEL_OK")
</pallas_src>

<mosaic_0001>
module attributes {stable_mosaic.version = 11 : i64} {
  func.func @_fused_mlp_kernel(%arg0: i32, %arg1: memref<8x128xf32, #tpu.memory_space<vmem>>, %arg2: memref<128x128xbf16, #tpu.memory_space<vmem>>, %arg3: memref<1x128xf32, #tpu.memory_space<vmem>>, %arg4: memref<128x128xbf16, #tpu.memory_space<vmem>>, %arg5: memref<1x128xf32, #tpu.memory_space<vmem>>, %arg6: memref<128x128xbf16, #tpu.memory_space<vmem>>, %arg7: memref<1x128xf32, #tpu.memory_space<vmem>>, %arg8: memref<8x128xf32, #tpu.memory_space<vmem>>) attributes {dimension_semantics = [#tpu.dimension_semantics<parallel>], iteration_bounds = array<i64: 1>, scalar_prefetch = 0 : i64, scratch_operands = 0 : i64, tpu.core_type = #tpu.core_type<tc>, window_params = [{transform_indices = @transform_0, window_bounds = array<i64: 8, 128>}, {pipeline_mode = #tpu.pipeline_mode<synchronous>, transform_indices = @transform_1, window_bounds = array<i64: 128, 128>}, {pipeline_mode = #tpu.pipeline_mode<synchronous>, transform_indices = @transform_2, window_bounds = array<i64: 1, 128>}, {pipeline_mode = #tpu.pipeline_mode<synchronous>, transform_indices = @transform_3, window_bounds = array<i64: 128, 128>}, {pipeline_mode = #tpu.pipeline_mode<synchronous>, transform_indices = @transform_4, window_bounds = array<i64: 1, 128>}, {pipeline_mode = #tpu.pipeline_mode<synchronous>, transform_indices = @transform_5, window_bounds = array<i64: 128, 128>}, {pipeline_mode = #tpu.pipeline_mode<synchronous>, transform_indices = @transform_6, window_bounds = array<i64: 1, 128>}, {transform_indices = @transform_7, window_bounds = array<i64: 8, 128>}]} {
    %c0 = arith.constant 0 : index
    %c0_0 = arith.constant 0 : index
    %0 = vector.load %arg1[%c0, %c0_0] : memref<8x128xf32, #tpu.memory_space<vmem>>, vector<8x128xf32>
    %c0_1 = arith.constant 0 : index
    %c0_2 = arith.constant 0 : index
    %1 = vector.load %arg2[%c0_1, %c0_2] : memref<128x128xbf16, #tpu.memory_space<vmem>>, vector<128x128xbf16>
    %c0_3 = arith.constant 0 : index
    %c0_4 = arith.constant 0 : index
    %2 = vector.load %arg3[%c0_3, %c0_4] : memref<1x128xf32, #tpu.memory_space<vmem>>, vector<1x128xf32>
    %3 = arith.truncf %0 : vector<8x128xf32> to vector<8x128xbf16>
    %cst = arith.constant dense<0.000000e+00> : vector<8x128xf32>
    %4 = tpu.matmul %3, %1, %cst {dimension_numbers = #tpu.dot_dimension_numbers<[1], [0], [0], [1], [0, 0, 1, 1], [], []>} : vector<8x128xbf16>, vector<128x128xbf16>, vector<8x128xf32> -> vector<8x128xf32>
    %5 = vector.broadcast %2 : vector<1x128xf32> to vector<8x128xf32>
    %6 = arith.addf %4, %5 : vector<8x128xf32>
    %7 = math.tanh %6 : vector<8x128xf32>
    %c0_5 = arith.constant 0 : index
    %c0_6 = arith.constant 0 : index
    %8 = vector.load %arg4[%c0_5, %c0_6] : memref<128x128xbf16, #tpu.memory_space<vmem>>, vector<128x128xbf16>
    %c0_7 = arith.constant 0 : index
    %c0_8 = arith.constant 0 : index
    %9 = vector.load %arg5[%c0_7, %c0_8] : memref<1x128xf32, #tpu.memory_space<vmem>>, vector<1x128xf32>
    %10 = arith.truncf %7 : vector<8x128xf32> to vector<8x128xbf16>
    %cst_9 = arith.constant dense<0.000000e+00> : vector<8x128xf32>
    %11 = tpu.matmul %10, %8, %cst_9 {dimension_numbers = #tpu.dot_dimension_numbers<[1], [0], [0], [1], [0, 0, 1, 1], [], []>} : vector<8x128xbf16>, vector<128x128xbf16>, vector<8x128xf32> -> vector<8x128xf32>
    %12 = vector.broadcast %9 : vector<1x128xf32> to vector<8x128xf32>
    %13 = arith.addf %11, %12 : vector<8x128xf32>
    %14 = math.tanh %13 : vector<8x128xf32>
    %c0_10 = arith.constant 0 : index
    %c0_11 = arith.constant 0 : index
    %15 = vector.load %arg6[%c0_10, %c0_11] : memref<128x128xbf16, #tpu.memory_space<vmem>>, vector<128x128xbf16>
    %c0_12 = arith.constant 0 : index
    %c0_13 = arith.constant 0 : index
    %16 = vector.load %arg7[%c0_12, %c0_13] : memref<1x128xf32, #tpu.memory_space<vmem>>, vector<1x128xf32>
    %17 = arith.truncf %14 : vector<8x128xf32> to vector<8x128xbf16>
    %cst_14 = arith.constant dense<0.000000e+00> : vector<8x128xf32>
    %18 = tpu.matmul %17, %15, %cst_14 {dimension_numbers = #tpu.dot_dimension_numbers<[1], [0], [0], [1], [0, 0, 1, 1], [], []>} : vector<8x128xbf16>, vector<128x128xbf16>, vector<8x128xf32> -> vector<8x128xf32>
    %19 = vector.broadcast %16 : vector<1x128xf32> to vector<8x128xf32>
    %20 = arith.addf %18, %19 : vector<8x128xf32>
    %c0_15 = arith.constant 0 : index
    %c0_16 = arith.constant 0 : index
    %21 = vector.load %arg8[%c0_15, %c0_16] : memref<8x128xf32, #tpu.memory_space<vmem>>, vector<8x128xf32>
    tpu.vector_store %arg8[%c0_15, %c0_16], %20 {strides = array<i32>} : memref<8x128xf32, #tpu.memory_space<vmem>>, vector<8x128xf32>,
    return
  }
  func.func @transform_0(%arg0: i32) -> (i32, i32) {
    %c0_i32 = arith.constant 0 : i32
    %c0_i32_0 = arith.constant 0 : i32
    return %arg0, %c0_i32 : i32, i32
  }
  func.func @transform_1(%arg0: i32) -> (i32, i32) {
    %c0_i32 = arith.constant 0 : i32
    %c0_i32_0 = arith.constant 0 : i32
    %c0_i32_1 = arith.constant 0 : i32
    return %c0_i32, %c0_i32_0 : i32, i32
  }
  func.func @transform_2(%arg0: i32) -> (i32, i32) {
    %c0_i32 = arith.constant 0 : i32
    %c0_i32_0 = arith.constant 0 : i32
    %c0_i32_1 = arith.constant 0 : i32
    return %c0_i32, %c0_i32_0 : i32, i32
  }
  func.func @transform_3(%arg0: i32) -> (i32, i32) {
    %c0_i32 = arith.constant 0 : i32
    %c0_i32_0 = arith.constant 0 : i32
    %c0_i32_1 = arith.constant 0 : i32
    return %c0_i32, %c0_i32_0 : i32, i32
  }
  func.func @transform_4(%arg0: i32) -> (i32, i32) {
    %c0_i32 = arith.constant 0 : i32
    %c0_i32_0 = arith.constant 0 : i32
    %c0_i32_1 = arith.constant 0 : i32
    return %c0_i32, %c0_i32_0 : i32, i32
  }
  func.func @transform_5(%arg0: i32) -> (i32, i32) {
    %c0_i32 = arith.constant 0 : i32
    %c0_i32_0 = arith.constant 0 : i32
    %c0_i32_1 = arith.constant 0 : i32
    return %c0_i32, %c0_i32_0 : i32, i32
  }
  func.func @transform_6(%arg0: i32) -> (i32, i32) {
    %c0_i32 = arith.constant 0 : i32
    %c0_i32_0 = arith.constant 0 : i32
    %c0_i32_1 = arith.constant 0 : i32
    return %c0_i32, %c0_i32_0 : i32, i32
  }
  func.func @transform_7(%arg0: i32) -> (i32, i32) {
    %c0_i32 = arith.constant 0 : i32
    %c0_i32_0 = arith.constant 0 : i32
    return %arg0, %c0_i32 : i32, i32
  }
}

</mosaic_0001>

<llo_original>
// kernel: tpu_custom_call.1
$region0: #{tpu_custom_call.1}
  #allocation0 [shape = 'u32[]', space=smem, size = 0x4, offset = 0x4, fixed_abs, tag = 'smem constant byte address 0x4 - core index']
  #allocation1 [shape = 'u32[144,128]{1,0:T(1,128)}', space=vmem, size = 0x12000, scoped, tag = 'internal scratch']
  %s0 = inlined_call_operand.hbm [shape: f32[8,128], index: 0, kind: input, shape index: {}]
  %s1 = inlined_call_operand.hbm [shape: bf16[128,128], index: 1, kind: input, shape index: {}]
  %s2 = inlined_call_operand.vmem [shape: f32[1,128], index: 2, kind: input, shape index: {}]
  %s3 = inlined_call_operand.hbm [shape: bf16[128,128], index: 3, kind: input, shape index: {}]
  %s4 = inlined_call_operand.vmem [shape: f32[1,128], index: 4, kind: input, shape index: {}]
  %s5 = inlined_call_operand.hbm [shape: bf16[128,128], index: 5, kind: input, shape index: {}]
  %s6 = inlined_call_operand.vmem [shape: f32[1,128], index: 6, kind: input, shape index: {}]
  %s7 = inlined_call_operand.hbm [shape: f32[8,128], index: 7, kind: output, shape index: {}]
  %s8 = sld [smem:[#allocation0]]
  $region54: #{tpu_custom_call.1} parent=0
    _
  %s10 = ssub.s32 1, %s8
  %s11 = scalar_select 0, %s10, %s8
  $region1: #{tpu_custom_call.1} parent=0
    #allocation2 [shape = 'u8[4096]{0}', space=vmem, size = 0x1000, scoped, tag = 'input window, operand 0, single buffered']
    #allocation3 [shape = 's32[1]{0}', space=sflag, size = 0x4, scoped, tag = 'scoped memory for tpu_custom_call.1']
    #allocation4 [shape = 's32[1]{0}', space=sflag, size = 0x4, scoped, tag = 'scoped memory for tpu_custom_call.1']
    #allocation5 [shape = 'u8[32768]{0}', space=vmem, size = 0x8000, scoped, tag = 'input window, operand 1, single buffered']
    #allocation6 [shape = 's32[1]{0}', space=sflag, size = 0x4, scoped, tag = 'scoped memory for tpu_custom_call.1']
    #allocation7 [shape = 'u8[32768]{0}', space=vmem, size = 0x8000, scoped, tag = 'input window, operand 3, single buffered']
    #allocation8 [shape = 'u8[32768]{0}', space=vmem, size = 0x8000, scoped, tag = 'input window, operand 5, single buffered']
    #allocation9 [shape = 's32[1]{0}', space=sflag, size = 0x4, scoped, tag = 'scoped memory for tpu_custom_call.1']
    #allocation10 [shape = 'u8[4096]{0}', space=vmem, size = 0x1000, scoped, tag = 'output window, operand 0, single buffered']
    %12 = vsyncpa [#allocation3], 0
    %13 = vsyncpa [#allocation6], 0
    %14 = vsyncpa [#allocation9], 0
    %15 = vsyncpa [#allocation4], 0
    // Predicated region
    $region2: #{tpu_custom_call.1} parent=1 // pred_check
      _
    $region3: #{tpu_custom_call.1} parent=1 // pred_check_branch
      %17 = sbr.rel (0) target = $region5
    $region4: #{tpu_custom_call.1} parent=1 // pred_region
      %s19 = ssub.s32 128, 128
      %20 = vsyncadd [#allocation3], %s19
      %s22 = sshll.u32 [#allocation2], 4
      %s23 = int_to_ptr.vmem [resolvable:$true] %s22
      %25 = dma.hbm_to_vmem [thread:$0]  %s0, 128, %s23, [#allocation3]
    $region5: #{tpu_custom_call.1} parent=1 // pred_fallthru
      _
    // Predicated region
    $region6: #{tpu_custom_call.1} parent=1 // pred_check
      _
    $region7: #{tpu_custom_call.1} parent=1 // pred_check_branch
      %27 = sbr.rel (0) target = $region9
    $region8: #{tpu_custom_call.1} parent=1 // pred_region
      %s29 = ssub.s32 1024, 1024
      %30 = vsyncadd [#allocation6], %s29
      %s31 = sshll.u32 [#allocation5], 4
      %s32 = int_to_ptr.vmem [resolvable:$true] %s31
      %37 = dma.hbm_to_vmem [thread:$0]  %s1, 1024, %s32, [#allocation6], 64, 64, 4
    $region9: #{tpu_custom_call.1} parent=1 // pred_fallthru
      _
    // Predicated region
    $region10: #{tpu_custom_call.1} parent=1 // pred_check
      _
    $region11: #{tpu_custom_call.1} parent=1 // pred_check_branch
      %39 = sbr.rel (0) target = $region13
    $region12: #{tpu_custom_call.1} parent=1 // pred_region
      _
    $region13: #{tpu_custom_call.1} parent=1 // pred_fallthru
      _
    // Predicated region
    $region14: #{tpu_custom_call.1} parent=1 // pred_check
      _
    $region15: #{tpu_custom_call.1} parent=1 // pred_check_branch
      %41 = sbr.rel (0) target = $region17
    $region16: #{tpu_custom_call.1} parent=1 // pred_region
      %s43 = ssub.s32 1024, 1024
      %44 = vsyncadd [#allocation6], %s43
      %s45 = sshll.u32 [#allocation7], 4
      %s46 = int_to_ptr.vmem [resolvable:$true] %s45
      %51 = dma.hbm_to_vmem [thread:$0]  %s3, 1024, %s46, [#allocation6], 64, 64, 4
    $region17: #{tpu_custom_call.1} parent=1 // pred_fallthru
      _
    // Predicated region
    $region18: #{tpu_custom_call.1} parent=1 // pred_check
      _
    $region19: #{tpu_custom_call.1} parent=1 // pred_check_branch
      %53 = sbr.rel (0) target = $region21
    $region20: #{tpu_custom_call.1} parent=1 // pred_region
      _
    $region21: #{tpu_custom_call.1} parent=1 // pred_fallthru
      _
    // Predicated region
    $region22: #{tpu_custom_call.1} parent=1 // pred_check
      _
    $region23: #{tpu_custom_call.1} parent=1 // pred_check_branch
      %55 = sbr.rel (0) target = $region25
    $region24: #{tpu_custom_call.1} parent=1 // pred_region
      %s57 = ssub.s32 1024, 1024
      %58 = vsyncadd [#allocation9], %s57
      %s59 = sshll.u32 [#allocation8], 4
      %s60 = int_to_ptr.vmem [resolvable:$true] %s59
      %65 = dma.hbm_to_vmem [thread:$0]  %s5, 1024, %s60, [#allocation9], 64, 64, 4
    $region25: #{tpu_custom_call.1} parent=1 // pred_fallthru
      _
    // Predicated region
    $region26: #{tpu_custom_call.1} parent=1 // pred_check
      _
    $region27: #{tpu_custom_call.1} parent=1 // pred_check_branch
      %67 = sbr.rel (0) target = $region29
    $region28: #{tpu_custom_call.1} parent=1 // pred_region
      _
    $region29: #{tpu_custom_call.1} parent=1 // pred_fallthru
      _
    // Predicated region
    $region30: #{tpu_custom_call.1} parent=1 // pred_check
      _
    $region31: #{tpu_custom_call.1} parent=1 // pred_check_branch
      %69 = sbr.rel (0) target = $region33
    $region32: #{tpu_custom_call.1} parent=1 // pred_region
      %70 = dma.done [#allocation3], 128
    $region33: #{tpu_custom_call.1} parent=1 // pred_fallthru
      _
    // Predicated region
    $region34: #{tpu_custom_call.1} parent=1 // pred_check
      _
    $region35: #{tpu_custom_call.1} parent=1 // pred_check_branch
      %72 = sbr.rel (0) target = $region37
    $region36: #{tpu_custom_call.1} parent=1 // pred_region
      %73 = dma.done [#allocation6], 1024
    $region37: #{tpu_custom_call.1} parent=1 // pred_fallthru
      _
    // Predicated region
    $region38: #{tpu_custom_call.1} parent=1 // pred_check
      _
    $region39: #{tpu_custom_call.1} parent=1 // pred_check_branch
      %75 = sbr.rel (0) target = $region41
    $region40: #{tpu_custom_call.1} parent=1 // pred_region
      %76 = dma.done [#allocation6], 1024
    $region41: #{tpu_custom_call.1} parent=1 // pred_fallthru
      _
    // Predicated region
    $region42: #{tpu_custom_call.1} parent=1 // pred_check
      _
    $region43: #{tpu_custom_call.1} parent=1 // pred_check_branch
      %78 = sbr.rel (0) target = $region45
    $region44: #{tpu_custom_call.1} parent=1 // pred_region
      %79 = dma.done [#allocation9], 1024
    $region45: #{tpu_custom_call.1} parent=1 // pred_fallthru
      _
    %v81 = vld [vmem:[#allocation2] sm:$0xff]
    %v82 = vld [vmem:[#allocation5] sm:$0xf]
    %v83 = vld [vmem:[#allocation5 + $0x4] sm:$0xf]
    %v84 = vld [vmem:[#allocation5 + $0x8] sm:$0xf]
    %v85 = vld [vmem:[#allocation5 + $0xc] sm:$0xf]
    %v86 = vld [vmem:[#allocation5 + $0x10] sm:$0xf]
    %v87 = vld [vmem:[#allocation5 + $0x14] sm:$0xf]
    %v88 = vld [vmem:[#allocation5 + $0x18] sm:$0xf]
    %v89 = vld [vmem:[#allocation5 + $0x1c] sm:$0xf]
    %v90 = vld [vmem:[#allocation5 + $0x20] sm:$0xf]
    %v91 = vld [vmem:[#allocation5 + $0x24] sm:$0xf]
    %v92 = vld [vmem:[#allocation5 + $0x28] sm:$0xf]
    %v93 = vld [vmem:[#allocation5 + $0x2c] sm:$0xf]
    %v94 = vld [vmem:[#allocation5 + $0x30] sm:$0xf]
    %v95 = vld [vmem:[#allocation5 + $0x34] sm:$0xf]
    %v96 = vld [vmem:[#allocation5 + $0x38] sm:$0xf]
    %v97 = vld [vmem:[#allocation5 + $0x3c] sm:$0xf]
    %v98 = vld [vmem:[%s2] sm:$0x1]
    %v99 = vpack.c.bf16 %v81, %v81
    %v101 = vlaneseq
    %v102 = vshrl.u32 %v101, 7
    %v103 = vsub.s32 0, %v102
    %v104 = vrot.slane %v98, %v103
    %v122 = vunpack.c.l.b16 %v82
    %v123 = vunpack.c.l.b16 %v83
    %v124 = vunpack.c.l.b16 %v84
    %v125 = vunpack.c.l.b16 %v85
    %v126 = vunpack.c.l.b16 %v86
    %v127 = vunpack.c.l.b16 %v87
    %v128 = vunpack.c.l.b16 %v88
    %v129 = vunpack.c.l.b16 %v89
    %v130 = vunpack.c.l.b16 %v90
    %v131 = vunpack.c.l.b16 %v91
    %v132 = vunpack.c.l.b16 %v92
    %v133 = vunpack.c.l.b16 %v93
    %v134 = vunpack.c.l.b16 %v94
    %v135 = vunpack.c.l.b16 %v95
    %v136 = vunpack.c.l.b16 %v96
    %v137 = vunpack.c.l.b16 %v97
    %v138 = vpack.c.b16 %v123, %v122
    %v139 = vpack.c.b16 %v125, %v124
    %v140 = vpack.c.b16 %v127, %v126
    %v141 = vpack.c.b16 %v129, %v128
    %v142 = vpack.c.b16 %v131, %v130
    %v143 = vpack.c.b16 %v133, %v132
    %v144 = vpack.c.b16 %v135, %v134
    %v145 = vpack.c.b16 %v137, %v136
    %154 = vmatprep.subr.bf16.mxu0 0
    %155 = vmatpush1.bf16.msra.mxu0 %v138
    %156 = vmatprep.subr.bf16.mxu0 0
    %157 = vmatpush1.bf16.msra.mxu0 %v139
    %158 = vmatprep.subr.bf16.mxu0 0
    %159 = vmatpush1.bf16.msra.mxu0 %v140
    %160 = vmatprep.subr.bf16.mxu0 0
    %161 = vmatpush1.bf16.msra.mxu0 %v141
    %162 = vmatprep.subr.bf16.mxu0 0
    %163 = vmatpush1.bf16.msra.mxu0 %v142
    %164 = vmatprep.subr.bf16.mxu0 0
    %165 = vmatpush1.bf16.msra.mxu0 %v143
    %166 = vmatprep.subr.bf16.mxu0 0
    %167 = vmatpush1.bf16.msra.mxu0 %v144
    %168 = vmatprep.subr.bf16.mxu0 0
    %169 = vmatpush1.bf16.msra.mxu0 %v145
    %170 = vmatprep.subr.bf16.mxu0 0
    %171 = vmatpush1.bf16.msra.mxu0 0
    %172 = vmatprep.subr.bf16.mxu0 0
    %173 = vmatpush1.bf16.msra.mxu0 0
    %174 = vmatprep.subr.bf16.mxu0 0
    %175 = vmatpush1.bf16.msra.mxu0 0
    %176 = vmatprep.subr.bf16.mxu0 0
    %177 = vmatpush1.bf16.msra.mxu0 0
    %178 = vmatprep.subr.bf16.mxu0 0
    %179 = vmatpush1.bf16.msra.mxu0 0
    %180 = vmatprep.subr.bf16.mxu0 0
    %181 = vmatpush1.bf16.msra.mxu0 0
    %182 = vmatprep.subr.bf16.mxu0 0
    %183 = vmatpush1.bf16.msra.mxu0 0
    %184 = vmatprep.subr.bf16.mxu0 0
    %185 = vmatpush1.bf16.msra.mxu0 0
    %186 = vmatprep.mubr.bf16.mxu0 0
    %187 = vmatmul.mubr.bf16.gmra.mrb[0].mxu0 %v99
    %v188 = vpop.f32.mrb[0].mxu0
    %v189 = vadd.f32 %v104, %v188
    %v190 = vpop.f32.mrb[0].mxu0
    %v191 = vpop.f32.mrb[0].mxu0
    %v192 = vpop.f32.mrb[0].mxu0
    %193 = vdwg.mxu0
    %v194 = vtanh.pop %v189
    %v195 = vld [vmem:[#allocation7] sm:$0xf]
    %v196 = vld [vmem:[#allocation7 + $0x4] sm:$0xf]
    %v197 = vld [vmem:[#allocation7 + $0x8] sm:$0xf]
    %v198 = vld [vmem:[#allocation7 + $0xc] sm:$0xf]
    %v199 = vld [vmem:[#allocation7 + $0x10] sm:$0xf]
    %v200 = vld [vmem:[#allocation7 + $0x14] sm:$0xf]
    %v201 = vld [vmem:[#allocation7 + $0x18] sm:$0xf]
    %v202 = vld [vmem:[#allocation7 + $0x1c] sm:$0xf]
    %v203 = vld [vmem:[#allocation7 + $0x20] sm:$0xf]
    %v204 = vld [vmem:[#allocation7 + $0x24] sm:$0xf]
    %v205 = vld [vmem:[#allocation7 + $0x28] sm:$0xf]
    %v206 = vld [vmem:[#allocation7 + $0x2c] sm:$0xf]
    %v207 = vld [vmem:[#allocation7 + $0x30] sm:$0xf]
    %v208 = vld [vmem:[#allocation7 + $0x34] sm:$0xf]
    %v209 = vld [vmem:[#allocation7 + $0x38] sm:$0xf]
    %v210 = vld [vmem:[#allocation7 + $0x3c] sm:$0xf]
    %v211 = vld [vmem:[%s4] sm:$0x1]
    %v212 = vpack.c.bf16 %v194, %v194
    %v214 = vlaneseq
    %v215 = vshrl.u32 %v214, 7
    %v216 = vsub.s32 0, %v215
    %v217 = vrot.slane %v211, %v216
    %v235 = vunpack.c.l.b16 %v195
    %v236 = vunpack.c.l.b16 %v196
    %v237 = vunpack.c.l.b16 %v197
    %v238 = vunpack.c.l.b16 %v198
    %v239 = vunpack.c.l.b16 %v199
    %v240 = vunpack.c.l.b16 %v200
    %v241 = vunpack.c.l.b16 %v201
    %v242 = vunpack.c.l.b16 %v202
    %v243 = vunpack.c.l.b16 %v203
    %v244 = vunpack.c.l.b16 %v204
    %v245 = vunpack.c.l.b16 %v205
    %v246 = vunpack.c.l.b16 %v206
    %v247 = vunpack.c.l.b16 %v207
    %v248 = vunpack.c.l.b16 %v208
    %v249 = vunpack.c.l.b16 %v209
    %v250 = vunpack.c.l.b16 %v210
    %v251 = vpack.c.b16 %v236, %v235
    %v252 = vpack.c.b16 %v238, %v237
    %v253 = vpack.c.b16 %v240, %v239
    %v254 = vpack.c.b16 %v242, %v241
    %v255 = vpack.c.b16 %v244, %v243
    %v256 = vpack.c.b16 %v246, %v245
    %v257 = vpack.c.b16 %v248, %v247
    %v258 = vpack.c.b16 %v250, %v249
    %267 = vmatprep.subr.bf16.mxu0 0
    %268 = vmatpush1.bf16.msra.mxu0 %v251
    %269 = vmatprep.subr.bf16.mxu0 0
    %270 = vmatpush1.bf16.msra.mxu0 %v252
    %271 = vmatprep.subr.bf16.mxu0 0
    %272 = vmatpush1.bf16.msra.mxu0 %v253
    %273 = vmatprep.subr.bf16.mxu0 0
    %274 = vmatpush1.bf16.msra.mxu0 %v254
    %275 = vmatprep.subr.bf16.mxu0 0
    %276 = vmatpush1.bf16.msra.mxu0 %v255
    %277 = vmatprep.subr.bf16.mxu0 0
    %278 = vmatpush1.bf16.msra.mxu0 %v256
    %279 = vmatprep.subr.bf16.mxu0 0
    %280 = vmatpush1.bf16.msra.mxu0 %v257
    %281 = vmatprep.subr.bf16.mxu0 0
    %282 = vmatpush1.bf16.msra.mxu0 %v258
    %283 = vmatprep.subr.bf16.mxu0 0
    %284 = vmatpush1.bf16.msra.mxu0 0
    %285 = vmatprep.subr.bf16.mxu0 0
    %286 = vmatpush1.bf16.msra.mxu0 0
    %287 = vmatprep.subr.bf16.mxu0 0
    %288 = vmatpush1.bf16.msra.mxu0 0
    %289 = vmatprep.subr.bf16.mxu0 0
    %290 = vmatpush1.bf16.msra.mxu0 0
    %291 = vmatprep.subr.bf16.mxu0 0
    %292 = vmatpush1.bf16.msra.mxu0 0
    %293 = vmatprep.subr.bf16.mxu0 0
    %294 = vmatpush1.bf16.msra.mxu0 0
    %295 = vmatprep.subr.bf16.mxu0 0
    %296 = vmatpush1.bf16.msra.mxu0 0
    %297 = vmatprep.subr.bf16.mxu0 0
    %298 = vmatpush1.bf16.msra.mxu0 0
    %299 = vmatprep.mubr.bf16.mxu0 0
    %300 = vmatmul.mubr.bf16.gmra.mrb[0].mxu0 %v212
    %v301 = vpop.f32.mrb[0].mxu0
    %v302 = vadd.f32 %v217, %v301
    %v303 = vpop.f32.mrb[0].mxu0
    %v304 = vpop.f32.mrb[0].mxu0
    %v305 = vpop.f32.mrb[0].mxu0
    %306 = vdwg.mxu0
    %v307 = vtanh.pop %v302
    %v308 = vld [vmem:[#allocation8] sm:$0xf]
    %v309 = vld [vmem:[#allocation8 + $0x4] sm:$0xf]
    %v310 = vld [vmem:[#allocation8 + $0x8] sm:$0xf]
    %v311 = vld [vmem:[#allocation8 + $0xc] sm:$0xf]
    %v312 = vld [vmem:[#allocation8 + $0x10] sm:$0xf]
    %v313 = vld [vmem:[#allocation8 + $0x14] sm:$0xf]
    %v314 = vld [vmem:[#allocation8 + $0x18] sm:$0xf]
    %v315 = vld [vmem:[#allocation8 + $0x1c] sm:$0xf]
    %v316 = vld [vmem:[#allocation8 + $0x20] sm:$0xf]
    %v317 = vld [vmem:[#allocation8 + $0x24] sm:$0xf]
    %v318 = vld [vmem:[#allocation8 + $0x28] sm:$0xf]
    %v319 = vld [vmem:[#allocation8 + $0x2c] sm:$0xf]
    %v320 = vld [vmem:[#allocation8 + $0x30] sm:$0xf]
    %v321 = vld [vmem:[#allocation8 + $0x34] sm:$0xf]
    %v322 = vld [vmem:[#allocation8 + $0x38] sm:$0xf]
    %v323 = vld [vmem:[#allocation8 + $0x3c] sm:$0xf]
    %v324 = vld [vmem:[%s6] sm:$0x1]
    %v325 = vpack.c.bf16 %v307, %v307
    %v327 = vlaneseq
    %v328 = vshrl.u32 %v327, 7
    %v329 = vsub.s32 0, %v328
    %v330 = vrot.slane %v324, %v329
    %v348 = vunpack.c.l.b16 %v308
    %v349 = vunpack.c.l.b16 %v309
    %v350 = vunpack.c.l.b16 %v310
    %v351 = vunpack.c.l.b16 %v311
    %v352 = vunpack.c.l.b16 %v312
    %v353 = vunpack.c.l.b16 %v313
    %v354 = vunpack.c.l.b16 %v314
    %v355 = vunpack.c.l.b16 %v315
    %v356 = vunpack.c.l.b16 %v316
    %v357 = vunpack.c.l.b16 %v317
    %v358 = vunpack.c.l.b16 %v318
    %v359 = vunpack.c.l.b16 %v319
    %v360 = vunpack.c.l.b16 %v320
    %v361 = vunpack.c.l.b16 %v321
    %v362 = vunpack.c.l.b16 %v322
    %v363 = vunpack.c.l.b16 %v323
    %v364 = vpack.c.b16 %v349, %v348
    %v365 = vpack.c.b16 %v351, %v350
    %v366 = vpack.c.b16 %v353, %v352
    %v367 = vpack.c.b16 %v355, %v354
    %v368 = vpack.c.b16 %v357, %v356
    %v369 = vpack.c.b16 %v359, %v358
    %v370 = vpack.c.b16 %v361, %v360
    %v371 = vpack.c.b16 %v363, %v362
    %380 = vmatprep.subr.bf16.mxu0 0
    %381 = vmatpush1.bf16.msra.mxu0 %v364
    %382 = vmatprep.subr.bf16.mxu0 0
    %383 = vmatpush1.bf16.msra.mxu0 %v365
    %384 = vmatprep.subr.bf16.mxu0 0
    %385 = vmatpush1.bf16.msra.mxu0 %v366
    %386 = vmatprep.subr.bf16.mxu0 0
    %387 = vmatpush1.bf16.msra.mxu0 %v367
    %388 = vmatprep.subr.bf16.mxu0 0
    %389 = vmatpush1.bf16.msra.mxu0 %v368
    %390 = vmatprep.subr.bf16.mxu0 0
    %391 = vmatpush1.bf16.msra.mxu0 %v369
    %392 = vmatprep.subr.bf16.mxu0 0
    %393 = vmatpush1.bf16.msra.mxu0 %v370
    %394 = vmatprep.subr.bf16.mxu0 0
    %395 = vmatpush1.bf16.msra.mxu0 %v371
    %396 = vmatprep.subr.bf16.mxu0 0
    %397 = vmatpush1.bf16.msra.mxu0 0
    %398 = vmatprep.subr.bf16.mxu0 0
    %399 = vmatpush1.bf16.msra.mxu0 0
    %400 = vmatprep.subr.bf16.mxu0 0
    %401 = vmatpush1.bf16.msra.mxu0 0
    %402 = vmatprep.subr.bf16.mxu0 0
    %403 = vmatpush1.bf16.msra.mxu0 0
    %404 = vmatprep.subr.bf16.mxu0 0
    %405 = vmatpush1.bf16.msra.mxu0 0
    %406 = vmatprep.subr.bf16.mxu0 0
    %407 = vmatpush1.bf16.msra.mxu0 0
    %408 = vmatprep.subr.bf16.mxu0 0
    %409 = vmatpush1.bf16.msra.mxu0 0
    %410 = vmatprep.subr.bf16.mxu0 0
    %411 = vmatpush1.bf16.msra.mxu0 0
    %412 = vmatprep.mubr.bf16.mxu0 0
    %413 = vmatmul.mubr.bf16.gmra.mrb[0].mxu0 %v325
    %v414 = vpop.f32.mrb[0].mxu0
    %v415 = vadd.f32 %v330, %v414
    %v416 = vpop.f32.mrb[0].mxu0
    %v417 = vpop.f32.mrb[0].mxu0
    %v418 = vpop.f32.mrb[0].mxu0
    %419 = vdwg.mxu0
    %420 = vst [vmem:[#allocation10] sm:$0xff] %v415
    // Predicated region
    $region46: #{tpu_custom_call.1} parent=1 // pred_check
      _
    $region47: #{tpu_custom_call.1} parent=1 // pred_check_branch
      %422 = sbr.rel (0) target = $region49
    $region48: #{tpu_custom_call.1} parent=1 // pred_region
      %s424 = ssub.s32 128, 128
      %425 = vsyncadd [#allocation4], %s424
      %s427 = sshll.u32 [#allocation10], 4
      %s428 = int_to_ptr.vmem [resolvable:$true] %s427
      %430 = dma.vmem_to_hbm [thread:$0]  %s428, 128, %s7, [#allocation4]
    $region49: #{tpu_custom_call.1} parent=1 // pred_fallthru
      _
    // Predicated region
    $region50: #{tpu_custom_call.1} parent=1 // pred_check
      _
    $region51: #{tpu_custom_call.1} parent=1 // pred_check_branch
      %432 = sbr.rel (0) target = $region53
    $region52: #{tpu_custom_call.1} parent=1 // pred_region
      %433 = dma.done [#allocation4], 128
    $region53: #{tpu_custom_call.1} parent=1 // pred_fallthru
      _
    %434 = vsyncpa [#allocation3], 1
    %435 = vsyncpa [#allocation6], 1
    %436 = vsyncpa [#allocation9], 1
    %437 = vsyncpa [#allocation4], 1

</llo_original>
